<compile_context>
chip_gen: v7x
topology: tpu7x:2x2x1
jax: 0.10.0
libtpu: 0.0.40
codegen_flags: <defaults>
</compile_context>

<pallas_src>
import jax
import jax.numpy as jnp
from jax.experimental import pallas as pl
from jax.experimental.pallas import tpu as pltpu


def attcss_kernel(x_ref,
                  wcat_ref, bcat_ref,        # fused [w1 | we | wv], [b1 | be | bv]
                  s1_ref, t1_ref,            # CssModel folded BN scale/shift
                  u_ref,                     # attention context vector, as a (1, H) row
                  s2_ref, t2_ref,            # AttentionM folded BN scale/shift
                  out_ref):
    TB, S, D = x_ref.shape
    H = s1_ref.shape[1]

    # One fused MXU matmul for all three projections: (TB*S, D) @ (D, 3H).
    x = x_ref[...].reshape(TB * S, D)
    h = jnp.dot(x, wcat_ref[...], preferred_element_type=jnp.float32) + bcat_ref[...]
    h = h.reshape(TB, S, 3 * H)

    # ---- CssModel branch: Linear -> BN(eval, folded) -> ReLU ----
    css = jnp.maximum(h[:, :, :H] * s1_ref[...] + t1_ref[...], 0.0)            # (TB, S, H)

    # ---- AttentionM branch: additive attention over the sequence axis ----
    e = jnp.tanh(h[:, :, H:2 * H])                                             # (TB, S, H)
    # score = e @ u done as VPU multiply + lane reduce (avoids an N=1 MXU matmul).
    score = jnp.sum(e * u_ref[...], axis=-1, keepdims=True)                    # (TB, S, 1)
    m = jnp.max(score, axis=1, keepdims=True)
    p = jnp.exp(score - m)
    alpha = p * pl.reciprocal(jnp.sum(p, axis=1, keepdims=True), approx=True)  # softmax over S
    v = h[:, :, 2 * H:]
    att = (alpha * v) * s2_ref[...] + t2_ref[...]                              # (TB, S, H)

    # Single lane-dense 2H-wide store (no masked half-width slice stores).
    out_ref[...] = jnp.concatenate([css, att], axis=-1).astype(out_ref.dtype)


def _pick_batch_tile(B, S, D, H, vmem_budget_bytes=24 * 1024 * 1024):
    """Batch tile TB: divides B, keeps double-buffered x+out tiles under the VMEM budget
    (sized for v7x's smaller VMEM), prefers >= 512 rows per tile when B allows."""
    bytes_per_batch = S * (D + 2 * H) * 4 * 2            # x tile + out tile, double-buffered, f32
    max_tb = max(1, vmem_budget_bytes // max(bytes_per_batch, 1))
    target_tb = max(1, -(-512 // S))                     # cdiv(512, S) rows per tile
    divisors = [d for d in range(1, B + 1) if B % d == 0 and d <= max_tb]
    if not divisors:
        return 1
    for d in divisors:                                   # smallest divisor meeting the row target
        if d >= target_tb:                               # keeps the grid as long as possible
            return d
    return divisors[-1]                                  # else: the largest feasible tile


def attcss_forward(x, params):
    B, S, D = x.shape
    H = params["w1"].shape[1]
    TB = _pick_batch_tile(B, S, D, H)

    # Host-side fusion of the three projections and biases.
    wcat = jnp.concatenate([params["w1"], params["we"], params["wv"]], axis=1)   # (D, 3H)
    bcat = jnp.concatenate([params["b1"], params["be"], params["bv"]], axis=1)   # (1, 3H)
    u_row = params["u"].T                                                        # (1, H)

    const2d = lambda shape: pl.BlockSpec(shape, lambda i: (0, 0))

    return pl.pallas_call(
        attcss_kernel,
        out_shape=jax.ShapeDtypeStruct((B, S, 2 * H), jnp.float32),
        grid_spec=pltpu.PrefetchScalarGridSpec(
            num_scalar_prefetch=0,
            grid=(B // TB,),
            in_specs=[
                pl.BlockSpec((TB, S, D), lambda i: (i, 0, 0)),   # x (multi-batch tile)
                const2d((D, 3 * H)),                             # fused weights
                const2d((1, 3 * H)),                             # fused biases
                const2d((1, H)),                                 # s1 (BN scale, Css)
                const2d((1, H)),                                 # t1 (BN shift, Css)
                const2d((1, H)),                                 # u  (attention vector, row)
                const2d((1, H)),                                 # s2 (BN scale, Att)
                const2d((1, H)),                                 # t2 (BN shift, Att)
            ],
            out_specs=pl.BlockSpec((TB, S, 2 * H), lambda i: (i, 0, 0)),
        ),
        compiler_params=pltpu.CompilerParams(dimension_semantics=("parallel",)),
    )(x, wcat, bcat, params["s1"], params["t1"], u_row, params["s2"], params["t2"])


def attcss_reference(x, p):
    """Pure-JAX reference of the same forward pass."""
    h1 = jnp.einsum("bsd,dh->bsh", x, p["w1"]) + p["b1"]
    css = jnp.maximum(h1 * p["s1"] + p["t1"], 0.0)
    e = jnp.tanh(jnp.einsum("bsd,dh->bsh", x, p["we"]) + p["be"])
    score = jnp.einsum("bsh,ho->bso", e, p["u"])                       # (B, S, 1)
    alpha = jax.nn.softmax(score, axis=1)
    v = jnp.einsum("bsd,dh->bsh", x, p["wv"]) + p["bv"]
    att = (alpha * v) * p["s2"] + p["t2"]
    return jnp.concatenate([css, att], axis=-1)


def init_params(key, D, H):
    ks = jax.random.split(key, 10)
    eps = 1e-5
    # BatchNorm (eval): gamma, beta, running_mean=0, running_var=1 -> folded scale/shift.
    gamma1 = jax.random.uniform(ks[0], (1, H), minval=0.5, maxval=1.5)
    beta1 = jax.random.normal(ks[1], (1, H)) * 0.1
    gamma2 = jax.random.uniform(ks[2], (1, H), minval=0.5, maxval=1.5)
    beta2 = jax.random.normal(ks[3], (1, H)) * 0.1
    scale1 = gamma1 / jnp.sqrt(1.0 + eps)
    shift1 = beta1
    scale2 = gamma2 / jnp.sqrt(1.0 + eps)
    shift2 = beta2
    return {
        "w1": jax.random.normal(ks[4], (D, H)) * (1.0 / jnp.sqrt(D)),
        "b1": jax.random.normal(ks[5], (1, H)) * 0.01,
        "s1": scale1, "t1": shift1,
        "we": jax.random.normal(ks[6], (D, H)) * (1.0 / jnp.sqrt(D)),
        "be": jnp.zeros((1, H)),
        "u": jax.random.normal(ks[7], (H, 1)) * (1.0 / jnp.sqrt(H)),
        "wv": jax.random.normal(ks[8], (D, H)) * (1.0 / jnp.sqrt(D)),
        "bv": jax.random.normal(ks[9], (1, H)) * 0.01,
        "s2": scale2, "t2": shift2,
    }


if __name__ == "__main__":
    B, S, D_in, H = 2, 8, 32, 16
    key = jax.random.PRNGKey(0)
    kx, kp = jax.random.split(key)
    x = jax.random.normal(kx, (B, S, D_in), dtype=jnp.float32)
    params = init_params(kp, D_in, H)

    out = attcss_forward(x, params)
    out = jax.block_until_ready(out)

    ref = attcss_reference(x, params)
    assert out.shape == (B, S, 2 * H), out.shape
    # Tolerance loosened slightly for the approx (EUP) reciprocal in the softmax.
    assert jnp.allclose(out, ref, atol=5e-3, rtol=5e-3), float(jnp.max(jnp.abs(out - ref)))
    print("KERNEL_OK")
</pallas_src>

<mosaic_0001>
module attributes {stable_mosaic.version = 11 : i64} {
  func.func @attcss_kernel(%arg0: i32, %arg1: memref<2x8x32xf32, #tpu.memory_space<vmem>>, %arg2: memref<32x48xf32, #tpu.memory_space<vmem>>, %arg3: memref<1x48xf32, #tpu.memory_space<vmem>>, %arg4: memref<1x16xf32, #tpu.memory_space<vmem>>, %arg5: memref<1x16xf32, #tpu.memory_space<vmem>>, %arg6: memref<1x16xf32, #tpu.memory_space<vmem>>, %arg7: memref<1x16xf32, #tpu.memory_space<vmem>>, %arg8: memref<1x16xf32, #tpu.memory_space<vmem>>, %arg9: memref<2x8x32xf32, #tpu.memory_space<vmem>>) attributes {dimension_semantics = [#tpu.dimension_semantics<parallel>], iteration_bounds = array<i64: 1>, scalar_prefetch = 0 : i64, scratch_operands = 0 : i64, tpu.core_type = #tpu.core_type<tc>, window_params = [{transform_indices = @transform_0, window_bounds = array<i64: 2, 8, 32>}, {pipeline_mode = #tpu.pipeline_mode<synchronous>, transform_indices = @transform_1, window_bounds = array<i64: 32, 48>}, {pipeline_mode = #tpu.pipeline_mode<synchronous>, transform_indices = @transform_2, window_bounds = array<i64: 1, 48>}, {pipeline_mode = #tpu.pipeline_mode<synchronous>, transform_indices = @transform_3, window_bounds = array<i64: 1, 16>}, {pipeline_mode = #tpu.pipeline_mode<synchronous>, transform_indices = @transform_4, window_bounds = array<i64: 1, 16>}, {pipeline_mode = #tpu.pipeline_mode<synchronous>, transform_indices = @transform_5, window_bounds = array<i64: 1, 16>}, {pipeline_mode = #tpu.pipeline_mode<synchronous>, transform_indices = @transform_6, window_bounds = array<i64: 1, 16>}, {pipeline_mode = #tpu.pipeline_mode<synchronous>, transform_indices = @transform_7, window_bounds = array<i64: 1, 16>}, {transform_indices = @transform_8, window_bounds = array<i64: 2, 8, 32>}]} {
    %c0 = arith.constant 0 : index
    %c0_0 = arith.constant 0 : index
    %c0_1 = arith.constant 0 : index
    %0 = vector.load %arg1[%c0, %c0_0, %c0_1] : memref<2x8x32xf32, #tpu.memory_space<vmem>>, vector<2x8x32xf32>
    %1 = vector.shape_cast %0 : vector<2x8x32xf32> to vector<16x32xf32>
    %c0_2 = arith.constant 0 : index
    %c0_3 = arith.constant 0 : index
    %2 = vector.load %arg2[%c0_2, %c0_3] : memref<32x48xf32, #tpu.memory_space<vmem>>, vector<32x48xf32>
    %cst = arith.constant dense<0.000000e+00> : vector<16x48xf32>
    %3 = tpu.matmul %1, %2, %cst {dimension_numbers = #tpu.dot_dimension_numbers<[1], [0], [0], [1], [0, 0, 1, 1], [], []>} : vector<16x32xf32>, vector<32x48xf32>, vector<16x48xf32> -> vector<16x48xf32>
    %c0_4 = arith.constant 0 : index
    %c0_5 = arith.constant 0 : index
    %4 = vector.load %arg3[%c0_4, %c0_5] : memref<1x48xf32, #tpu.memory_space<vmem>>, vector<1x48xf32>
    %5 = vector.broadcast %4 : vector<1x48xf32> to vector<16x48xf32>
    %6 = arith.addf %3, %5 : vector<16x48xf32>
    %7 = vector.shape_cast %6 : vector<16x48xf32> to vector<2x8x48xf32>
    %8 = vector.extract_strided_slice %7 {offsets = [0, 0, 0], sizes = [2, 8, 16], strides = [1, 1, 1]} : vector<2x8x48xf32> to vector<2x8x16xf32>
    %c0_6 = arith.constant 0 : index
    %c0_7 = arith.constant 0 : index
    %9 = vector.load %arg4[%c0_6, %c0_7] : memref<1x16xf32, #tpu.memory_space<vmem>>, vector<1x16xf32>
    %10 = vector.shape_cast %9 : vector<1x16xf32> to vector<1x1x16xf32>
    %11 = vector.broadcast %10 : vector<1x1x16xf32> to vector<2x8x16xf32>
    %12 = arith.mulf %8, %11 : vector<2x8x16xf32>
    %c0_8 = arith.constant 0 : index
    %c0_9 = arith.constant 0 : index
    %13 = vector.load %arg5[%c0_8, %c0_9] : memref<1x16xf32, #tpu.memory_space<vmem>>, vector<1x16xf32>
    %14 = vector.shape_cast %13 : vector<1x16xf32> to vector<1x1x16xf32>
    %15 = vector.broadcast %14 : vector<1x1x16xf32> to vector<2x8x16xf32>
    %16 = arith.addf %12, %15 : vector<2x8x16xf32>
    %cst_10 = arith.constant 0.000000e+00 : f32
    %17 = vector.broadcast %cst_10 : f32 to vector<2x8x16xf32>
    %18 = arith.maximumf %16, %17 : vector<2x8x16xf32>
    %19 = vector.extract_strided_slice %7 {offsets = [0, 0, 16], sizes = [2, 8, 16], strides = [1, 1, 1]} : vector<2x8x48xf32> to vector<2x8x16xf32>
    %20 = math.tanh %19 : vector<2x8x16xf32>
    %c0_11 = arith.constant 0 : index
    %c0_12 = arith.constant 0 : index
    %21 = vector.load %arg6[%c0_11, %c0_12] : memref<1x16xf32, #tpu.memory_space<vmem>>, vector<1x16xf32>
    %22 = vector.shape_cast %21 : vector<1x16xf32> to vector<1x1x16xf32>
    %23 = vector.broadcast %22 : vector<1x1x16xf32> to vector<2x8x16xf32>
    %24 = arith.mulf %20, %23 : vector<2x8x16xf32>
    %cst_13 = arith.constant dense<0.000000e+00> : vector<2x8xf32>
    %25 = vector.multi_reduction <add>, %24, %cst_13 [2] : vector<2x8x16xf32> to vector<2x8xf32>
    %26 = vector.shape_cast %25 : vector<2x8xf32> to vector<2x8x1xf32>
    %cst_14 = arith.constant dense<0xFF800000> : vector<2x1xf32>
    %27 = vector.multi_reduction <maximumf>, %26, %cst_14 [1] : vector<2x8x1xf32> to vector<2x1xf32>
    %28 = vector.shape_cast %27 : vector<2x1xf32> to vector<2x1x1xf32>
    %29 = vector.broadcast %28 : vector<2x1x1xf32> to vector<2x8x1xf32>
    %30 = arith.subf %26, %29 : vector<2x8x1xf32>
    %31 = math.exp %30 : vector<2x8x1xf32>
    %cst_15 = arith.constant dense<0.000000e+00> : vector<2x1xf32>
    %32 = vector.multi_reduction <add>, %31, %cst_15 [1] : vector<2x8x1xf32> to vector<2x1xf32>
    %33 = vector.shape_cast %32 : vector<2x1xf32> to vector<2x1x1xf32>
    %34 = tpu.reciprocal %33 {approx = true} : vector<2x1x1xf32> -> vector<2x1x1xf32>
    %35 = vector.broadcast %34 : vector<2x1x1xf32> to vector<2x8x1xf32>
    %36 = arith.mulf %31, %35 : vector<2x8x1xf32>
    %37 = vector.extract_strided_slice %7 {offsets = [0, 0, 32], sizes = [2, 8, 16], strides = [1, 1, 1]} : vector<2x8x48xf32> to vector<2x8x16xf32>
    %38 = vector.broadcast %36 : vector<2x8x1xf32> to vector<2x8x16xf32>
    %39 = arith.mulf %38, %37 : vector<2x8x16xf32>
    %c0_16 = arith.constant 0 : index
    %c0_17 = arith.constant 0 : index
    %40 = vector.load %arg7[%c0_16, %c0_17] : memref<1x16xf32, #tpu.memory_space<vmem>>, vector<1x16xf32>
    %41 = vector.shape_cast %40 : vector<1x16xf32> to vector<1x1x16xf32>
    %42 = vector.broadcast %41 : vector<1x1x16xf32> to vector<2x8x16xf32>
    %43 = arith.mulf %39, %42 : vector<2x8x16xf32>
    %c0_18 = arith.constant 0 : index
    %c0_19 = arith.constant 0 : index
    %44 = vector.load %arg8[%c0_18, %c0_19] : memref<1x16xf32, #tpu.memory_space<vmem>>, vector<1x16xf32>
    %45 = vector.shape_cast %44 : vector<1x16xf32> to vector<1x1x16xf32>
    %46 = vector.broadcast %45 : vector<1x1x16xf32> to vector<2x8x16xf32>
    %47 = arith.addf %43, %46 : vector<2x8x16xf32>
    %48 = tpu.concatenate %18, %47 in 2 : vector<2x8x16xf32>, vector<2x8x16xf32> -> vector<2x8x32xf32>
    %c0_20 = arith.constant 0 : index
    %c0_21 = arith.constant 0 : index
    %c0_22 = arith.constant 0 : index
    %49 = vector.load %arg9[%c0_20, %c0_21, %c0_22] : memref<2x8x32xf32, #tpu.memory_space<vmem>>, vector<2x8x32xf32>
    tpu.vector_store %arg9[%c0_20, %c0_21, %c0_22], %48 {strides = array<i32>} : memref<2x8x32xf32, #tpu.memory_space<vmem>>, vector<2x8x32xf32>,
    return
  }
  func.func @transform_0(%arg0: i32) -> (i32, i32, i32) {
    %c0_i32 = arith.constant 0 : i32
    %c0_i32_0 = arith.constant 0 : i32
    %c0_i32_1 = arith.constant 0 : i32
    return %arg0, %c0_i32, %c0_i32_0 : i32, i32, i32
  }
  func.func @transform_1(%arg0: i32) -> (i32, i32) {
    %c0_i32 = arith.constant 0 : i32
    %c0_i32_0 = arith.constant 0 : i32
    %c0_i32_1 = arith.constant 0 : i32
    return %c0_i32, %c0_i32_0 : i32, i32
  }
  func.func @transform_2(%arg0: i32) -> (i32, i32) {
    %c0_i32 = arith.constant 0 : i32
    %c0_i32_0 = arith.constant 0 : i32
    %c0_i32_1 = arith.constant 0 : i32
    return %c0_i32, %c0_i32_0 : i32, i32
  }
  func.func @transform_3(%arg0: i32) -> (i32, i32) {
    %c0_i32 = arith.constant 0 : i32
    %c0_i32_0 = arith.constant 0 : i32
    %c0_i32_1 = arith.constant 0 : i32
    return %c0_i32, %c0_i32_0 : i32, i32
  }
  func.func @transform_4(%arg0: i32) -> (i32, i32) {
    %c0_i32 = arith.constant 0 : i32
    %c0_i32_0 = arith.constant 0 : i32
    %c0_i32_1 = arith.constant 0 : i32
    return %c0_i32, %c0_i32_0 : i32, i32
  }
  func.func @transform_5(%arg0: i32) -> (i32, i32) {
    %c0_i32 = arith.constant 0 : i32
    %c0_i32_0 = arith.constant 0 : i32
    %c0_i32_1 = arith.constant 0 : i32
    return %c0_i32, %c0_i32_0 : i32, i32
  }
  func.func @transform_6(%arg0: i32) -> (i32, i32) {
    %c0_i32 = arith.constant 0 : i32
    %c0_i32_0 = arith.constant 0 : i32
    %c0_i32_1 = arith.constant 0 : i32
    return %c0_i32, %c0_i32_0 : i32, i32
  }
  func.func @transform_7(%arg0: i32) -> (i32, i32) {
    %c0_i32 = arith.constant 0 : i32
    %c0_i32_0 = arith.constant 0 : i32
    %c0_i32_1 = arith.constant 0 : i32
    return %c0_i32, %c0_i32_0 : i32, i32
  }
  func.func @transform_8(%arg0: i32) -> (i32, i32, i32) {
    %c0_i32 = arith.constant 0 : i32
    %c0_i32_0 = arith.constant 0 : i32
    %c0_i32_1 = arith.constant 0 : i32
    return %arg0, %c0_i32, %c0_i32_0 : i32, i32, i32
  }
}

</mosaic_0001>

<llo_original>
// kernel: tpu_custom_call.1
$region0: #{tpu_custom_call.1}
  #allocation0 [shape = 'u32[]', space=smem, size = 0x4, offset = 0x4, fixed_abs, tag = 'smem constant byte address 0x4 - core index']
  #allocation1 [shape = 'u32[144,128]{1,0:T(1,128)}', space=vmem, size = 0x12000, scoped, tag = 'internal scratch']
  %s0 = inlined_call_operand.hbm [shape: f32[2,8,32], index: 0, kind: input, shape index: {}]
  %s1 = inlined_call_operand.hbm [shape: f32[32,48], index: 1, kind: input, shape index: {}]
  %s2 = inlined_call_operand.vmem [shape: f32[1,48], index: 2, kind: input, shape index: {}]
  %s3 = inlined_call_operand.vmem [shape: f32[1,16], index: 3, kind: input, shape index: {}]
  %s4 = inlined_call_operand.vmem [shape: f32[1,16], index: 4, kind: input, shape index: {}]
  %s5 = inlined_call_operand.vmem [shape: f32[1,16], index: 5, kind: input, shape index: {}]
  %s6 = inlined_call_operand.vmem [shape: f32[1,16], index: 6, kind: input, shape index: {}]
  %s7 = inlined_call_operand.vmem [shape: f32[1,16], index: 7, kind: input, shape index: {}]
  %s8 = inlined_call_operand.hbm [shape: f32[2,8,32], index: 8, kind: output, shape index: {}]
  %s9 = sld [smem:[#allocation0]]
  $region50: #{tpu_custom_call.1} parent=0
    _
  %s11 = ssub.s32 1, %s9
  %s12 = scalar_select 0, %s11, %s9
  $region1: #{tpu_custom_call.1} parent=0
    #allocation2 [shape = 'u8[8192]{0}', space=vmem, size = 0x2000, scoped, tag = 'input window, operand 0, single buffered']
    #allocation3 [shape = 's32[1]{0}', space=sflag, size = 0x4, scoped, tag = 'scoped memory for tpu_custom_call.1']
    #allocation4 [shape = 's32[1]{0}', space=sflag, size = 0x4, scoped, tag = 'scoped memory for tpu_custom_call.1']
    #allocation5 [shape = 'u8[16384]{0}', space=vmem, size = 0x4000, scoped, tag = 'input window, operand 1, single buffered']
    #allocation6 [shape = 's32[1]{0}', space=sflag, size = 0x4, scoped, tag = 'scoped memory for tpu_custom_call.1']
    #allocation7 [shape = 'u8[8192]{0}', space=vmem, size = 0x2000, scoped, tag = 'output window, operand 0, single buffered']
    %13 = vsyncpa [#allocation3], 0
    %14 = vsyncpa [#allocation6], 0
    %15 = vsyncpa [#allocation4], 0
    // Predicated region
    $region2: #{tpu_custom_call.1} parent=1 // pred_check
      _
    $region3: #{tpu_custom_call.1} parent=1 // pred_check_branch
      %17 = sbr.rel (0) target = $region5
    $region4: #{tpu_custom_call.1} parent=1 // pred_region
      %s19 = ssub.s32 256, 256
      %20 = vsyncadd [#allocation3], %s19
      %s21 = sshll.u32 [#allocation2], 4
      %s22 = int_to_ptr.vmem [resolvable:$true] %s21
      %27 = dma.hbm_to_vmem [thread:$0]  %s0, 256, %s22, [#allocation3], 128, 128, 8
    $region5: #{tpu_custom_call.1} parent=1 // pred_fallthru
      _
    // Predicated region
    $region6: #{tpu_custom_call.1} parent=1 // pred_check
      _
    $region7: #{tpu_custom_call.1} parent=1 // pred_check_branch
      %29 = sbr.rel (0) target = $region9
    $region8: #{tpu_custom_call.1} parent=1 // pred_region
      %s31 = ssub.s32 512, 512
      %32 = vsyncadd [#allocation6], %s31
      %s33 = sshll.u32 [#allocation5], 4
      %s34 = int_to_ptr.vmem [resolvable:$true] %s33
      %39 = dma.hbm_to_vmem [thread:$0]  %s1, 512, %s34, [#allocation6], 128, 128, 8
    $region9: #{tpu_custom_call.1} parent=1 // pred_fallthru
      _
    // Predicated region
    $region10: #{tpu_custom_call.1} parent=1 // pred_check
      _
    $region11: #{tpu_custom_call.1} parent=1 // pred_check_branch
      %41 = sbr.rel (0) target = $region13
    $region12: #{tpu_custom_call.1} parent=1 // pred_region
      _
    $region13: #{tpu_custom_call.1} parent=1 // pred_fallthru
      _
    // Predicated region
    $region14: #{tpu_custom_call.1} parent=1 // pred_check
      _
    $region15: #{tpu_custom_call.1} parent=1 // pred_check_branch
      %43 = sbr.rel (0) target = $region17
    $region16: #{tpu_custom_call.1} parent=1 // pred_region
      _
    $region17: #{tpu_custom_call.1} parent=1 // pred_fallthru
      _
    // Predicated region
    $region18: #{tpu_custom_call.1} parent=1 // pred_check
      _
    $region19: #{tpu_custom_call.1} parent=1 // pred_check_branch
      %45 = sbr.rel (0) target = $region21
    $region20: #{tpu_custom_call.1} parent=1 // pred_region
      _
    $region21: #{tpu_custom_call.1} parent=1 // pred_fallthru
      _
    // Predicated region
    $region22: #{tpu_custom_call.1} parent=1 // pred_check
      _
    $region23: #{tpu_custom_call.1} parent=1 // pred_check_branch
      %47 = sbr.rel (0) target = $region25
    $region24: #{tpu_custom_call.1} parent=1 // pred_region
      _
    $region25: #{tpu_custom_call.1} parent=1 // pred_fallthru
      _
    // Predicated region
    $region26: #{tpu_custom_call.1} parent=1 // pred_check
      _
    $region27: #{tpu_custom_call.1} parent=1 // pred_check_branch
      %49 = sbr.rel (0) target = $region29
    $region28: #{tpu_custom_call.1} parent=1 // pred_region
      _
    $region29: #{tpu_custom_call.1} parent=1 // pred_fallthru
      _
    // Predicated region
    $region30: #{tpu_custom_call.1} parent=1 // pred_check
      _
    $region31: #{tpu_custom_call.1} parent=1 // pred_check_branch
      %51 = sbr.rel (0) target = $region33
    $region32: #{tpu_custom_call.1} parent=1 // pred_region
      _
    $region33: #{tpu_custom_call.1} parent=1 // pred_fallthru
      _
    // Predicated region
    $region34: #{tpu_custom_call.1} parent=1 // pred_check
      _
    $region35: #{tpu_custom_call.1} parent=1 // pred_check_branch
      %53 = sbr.rel (0) target = $region37
    $region36: #{tpu_custom_call.1} parent=1 // pred_region
      %54 = dma.done [#allocation3], 256
    $region37: #{tpu_custom_call.1} parent=1 // pred_fallthru
      _
    // Predicated region
    $region38: #{tpu_custom_call.1} parent=1 // pred_check
      _
    $region39: #{tpu_custom_call.1} parent=1 // pred_check_branch
      %56 = sbr.rel (0) target = $region41
    $region40: #{tpu_custom_call.1} parent=1 // pred_region
      %57 = dma.done [#allocation6], 512
    $region41: #{tpu_custom_call.1} parent=1 // pred_fallthru
      _
    %v58 = vld [vmem:[#allocation2] sm:$0xff]
    %v59 = vld [vmem:[#allocation2 + $0x8] sm:$0xff]
    %v60 = vld [vmem:[#allocation5] sm:$0xff]
    %v61 = vld [vmem:[#allocation5 + $0x8] sm:$0xff]
    %v62 = vld [vmem:[#allocation5 + $0x10] sm:$0xff]
    %v63 = vld [vmem:[#allocation5 + $0x18] sm:$0xff]
    %v64 = vld [vmem:[%s2] sm:$0x1]
    %v66 = vlaneseq
    %v67 = vshrl.u32 %v66, 7
    %v68 = vsub.s32 0, %v67
    %v69 = vrot.slane %v64, %v68
    %vm71 = vcmask 261120
    %v73 = vsel %vm71, %v58, 0
    %v76 = vsel %vm71, %v59, 0
    %78 = vmatprep.subr.mxu0 0.0
    %79 = vmatpush1.msra.mxu0 %v60
    %80 = vmatprep.subr.mxu0 0.0
    %81 = vmatpush1.msra.mxu0 %v61
    %82 = vmatprep.subr.mxu0 0.0
    %83 = vmatpush1.msra.mxu0 %v62
    %84 = vmatprep.subr.mxu0 0.0
    %85 = vmatpush1.msra.mxu0 %v63
    %86 = vmatprep.subr.mxu0 0.0
    %87 = vmatpush1.msra.mxu0 0.0
    %88 = vmatprep.subr.mxu0 0.0
    %89 = vmatpush1.msra.mxu0 0.0
    %90 = vmatprep.subr.mxu0 0.0
    %91 = vmatpush1.msra.mxu0 0.0
    %92 = vmatprep.subr.mxu0 0.0
    %93 = vmatpush1.msra.mxu0 0.0
    %94 = vmatprep.subr.mxu0 0.0
    %95 = vmatpush1.msra.mxu0 0.0
    %96 = vmatprep.subr.mxu0 0.0
    %97 = vmatpush1.msra.mxu0 0.0
    %98 = vmatprep.subr.mxu0 0.0
    %99 = vmatpush1.msra.mxu0 0.0
    %100 = vmatprep.subr.mxu0 0.0
    %101 = vmatpush1.msra.mxu0 0.0
    %102 = vmatprep.subr.mxu0 0.0
    %103 = vmatpush1.msra.mxu0 0.0
    %104 = vmatprep.subr.mxu0 0.0
    %105 = vmatpush1.msra.mxu0 0.0
    %106 = vmatprep.subr.mxu0 0.0
    %107 = vmatpush1.msra.mxu0 0.0
    %108 = vmatprep.subr.mxu0 0.0
    %109 = vmatpush1.msra.mxu0 0.0
    %110 = vmatprep.subr.mxu0 0.0
    %111 = vmatpush1.msra.mxu0 0.0
    %112 = vmatprep.subr.mxu0 0.0
    %113 = vmatpush1.msra.mxu0 0.0
    %114 = vmatprep.subr.mxu0 0.0
    %115 = vmatpush1.msra.mxu0 0.0
    %116 = vmatprep.subr.mxu0 0.0
    %117 = vmatpush1.msra.mxu0 0.0
    %118 = vmatprep.subr.mxu0 0.0
    %119 = vmatpush1.msra.mxu0 0.0
    %120 = vmatprep.subr.mxu0 0.0
    %121 = vmatpush1.msra.mxu0 0.0
    %122 = vmatprep.subr.mxu0 0.0
    %123 = vmatpush1.msra.mxu0 0.0
    %124 = vmatprep.subr.mxu0 0.0
    %125 = vmatpush1.msra.mxu0 0.0
    %126 = vmatprep.subr.mxu0 0.0
    %127 = vmatpush1.msra.mxu0 0.0
    %128 = vmatprep.subr.mxu0 0.0
    %129 = vmatpush1.msra.mxu0 0.0
    %130 = vmatprep.subr.mxu0 0.0
    %131 = vmatpush1.msra.mxu0 0.0
    %132 = vmatprep.subr.mxu0 0.0
    %133 = vmatpush1.msra.mxu0 0.0
    %134 = vmatprep.subr.mxu0 0.0
    %135 = vmatpush1.msra.mxu0 0.0
    %136 = vmatprep.subr.mxu0 0.0
    %137 = vmatpush1.msra.mxu0 0.0
    %138 = vmatprep.subr.mxu0 0.0
    %139 = vmatpush1.msra.mxu0 0.0
    %140 = vmatprep.subr.mxu0 0.0
    %141 = vmatpush1.msra.mxu0 0.0
    %142 = vmatprep.mubr.f32.mxu0 0.0
    %143 = vmatmul.mubr.f32.gmra.mrb[0].mxu0 %v73
    %v144 = vpop.f32.mrb[0].mxu0
    %v145 = vadd.f32 %v69, %v144
    %v146 = vpop.f32.mrb[0].mxu0
    %147 = vmatprep.mubr.f32.mxu0 0.0
    %148 = vmatmul.mubr.f32.gmra.mrb[0].mxu0 %v76
    %v149 = vpop.f32.mrb[0].mxu0
    %v150 = vadd.f32 %v69, %v149
    %v151 = vpop.f32.mrb[0].mxu0
    %152 = vdwg.mxu0
    %v153 = vld [vmem:[%s3] sm:$0x1]
    %v155 = vlaneseq
    %v156 = vshrl.u32 %v155, 7
    %v157 = vsub.s32 0, %v156
    %v158 = vrot.slane %v153, %v157
    %v160 = vmul.f32 %v145, %v158
    %v161 = vmul.f32 %v150, %v158
    %v162 = vld [vmem:[%s4] sm:$0x1]
    %v164 = vlaneseq
    %v165 = vshrl.u32 %v164, 7
    %v166 = vsub.s32 0, %v165
    %v167 = vrot.slane %v162, %v166
    %v169 = vadd.f32 %v160, %v167
    %v170 = vadd.f32 %v161, %v167
    %v171 = vmax.f32 %v169, 0.0
    %v172 = vmax.f32 %v170, 0.0
    %v173 = vtanh.pop %v145
    %v174 = vtanh.pop %v150
    %v175 = vld [vmem:[%s5] sm:$0x1]
    %v177 = vlaneseq
    %v178 = vshrl.u32 %v177, 7
    %v179 = vsub.s32 0, %v178
    %v180 = vrot.slane %v175, %v179
    %181 = vrot.lane.b32.xlu0 %v180, 16
    %v182 = vpop.permute.xlu0 %181
    %v184 = vmul.f32 %v173, %v182
    %v185 = vmul.f32 %v174, %v182
    %188 = vrot.lane.b32.xlu0 %v184, 112
    %v189 = vpop.permute.xlu0 %188
    %190 = vrot.lane.b32.xlu0 %v185, 112
    %v191 = vpop.permute.xlu0 %190
    %vm194 = vcmask 130048
    %v195 = vsel %vm194, %v189, 0.0
    %196 = vadd.xlane.f32.xlu0 %v195
    %v197 = vpop.xlane.xlu0 %196
    %v198 = vsel %vm194, %v191, 0.0
    %199 = vadd.xlane.f32.xlu0 %v198
    %v200 = vpop.xlane.xlu0 %199
    %v201 = vrot.slane %v197, 4
    %v202 = vmax.f32 %v197, %v201
    %v203 = vrot.slane %v202, 2
    %v204 = vmax.f32 %v202, %v203
    %v205 = vrot.slane %v204, 1
    %v206 = vmax.f32 %v204, %v205
    %v207 = vrot.slane %v200, 4
    %v208 = vmax.f32 %v200, %v207
    %v209 = vrot.slane %v208, 2
    %v210 = vmax.f32 %v208, %v209
    %v211 = vrot.slane %v210, 1
    %v212 = vmax.f32 %v210, %v211
    %v213 = vsub.f32 %v197, %v206
    %v214 = vsub.f32 %v200, %v212
    %v215 = vmul.f32 %v213, 1.442695
    %v216 = vpow.pop %v215
    %v217 = vmul.f32 %v214, 1.442695
    %v218 = vpow.pop %v217
    %v219 = vrot.slane %v216, 4
    %v220 = vadd.f32 %v216, %v219
    %v221 = vrot.slane %v220, 2
    %v222 = vadd.f32 %v220, %v221
    %v223 = vrot.slane %v222, 1
    %v224 = vadd.f32 %v222, %v223
    %v225 = vrot.slane %v218, 4
    %v226 = vadd.f32 %v218, %v225
    %v227 = vrot.slane %v226, 2
    %v228 = vadd.f32 %v226, %v227
    %v229 = vrot.slane %v228, 1
    %v230 = vadd.f32 %v228, %v229
    %v231 = vrcp.pop %v224
    %v232 = vrcp.pop %v230
    %v233 = vmul.f32 %v216, %v231
    %v234 = vmul.f32 %v218, %v232
    %v235 = vmul.f32 %v233, %v145
    %v236 = vmul.f32 %v234, %v150
    %v237 = vld [vmem:[%s6] sm:$0x1]
    %v239 = vlaneseq
    %v240 = vshrl.u32 %v239, 7
    %v241 = vsub.s32 0, %v240
    %v242 = vrot.slane %v237, %v241
    %243 = vrot.lane.b32.xlu0 %v242, 32
    %v244 = vpop.permute.xlu0 %243
    %v246 = vmul.f32 %v235, %v244
    %v247 = vmul.f32 %v236, %v244
    %v248 = vld [vmem:[%s7] sm:$0x1]
    %v250 = vlaneseq
    %v251 = vshrl.u32 %v250, 7
    %v252 = vsub.s32 0, %v251
    %v253 = vrot.slane %v248, %v252
    %254 = vrot.lane.b32.xlu0 %v253, 32
    %v255 = vpop.permute.xlu0 %254
    %v257 = vadd.f32 %v246, %v255
    %v258 = vadd.f32 %v247, %v255
    %261 = vrot.lane.b32.xlu0 %v257, 112
    %v262 = vpop.permute.xlu0 %261
    %263 = vrot.lane.b32.xlu0 %v258, 112
    %v264 = vpop.permute.xlu0 %263
    %v267 = vsel %vm194, %v171, %v262
    %v268 = vsel %vm194, %v172, %v264
    %269 = vst.msk [vmem:[#allocation7] sm:$0xff] %vm71, %v267
    %270 = vst.msk [vmem:[#allocation7 + $0x8] sm:$0xff] %vm71, %v268
    // Predicated region
    $region42: #{tpu_custom_call.1} parent=1 // pred_check
      _
    $region43: #{tpu_custom_call.1} parent=1 // pred_check_branch
      %272 = sbr.rel (0) target = $region45
    $region44: #{tpu_custom_call.1} parent=1 // pred_region
      %s274 = ssub.s32 256, 256
      %275 = vsyncadd [#allocation4], %s274
      %s276 = sshll.u32 [#allocation7], 4
      %s277 = int_to_ptr.vmem [resolvable:$true] %s276
      %282 = dma.vmem_to_hbm [thread:$0]  %s277, 256, %s8, [#allocation4], 128, 128, 8
    $region45: #{tpu_custom_call.1} parent=1 // pred_fallthru
      _
    // Predicated region
    $region46: #{tpu_custom_call.1} parent=1 // pred_check
      _
    $region47: #{tpu_custom_call.1} parent=1 // pred_check_branch
      %284 = sbr.rel (0) target = $region49
    $region48: #{tpu_custom_call.1} parent=1 // pred_region
      %285 = dma.done [#allocation4], 256
    $region49: #{tpu_custom_call.1} parent=1 // pred_fallthru
      _
    %286 = vsyncpa [#allocation3], 1
    %287 = vsyncpa [#allocation6], 1
    %288 = vsyncpa [#allocation4], 1

</llo_original>
